<compile_context>
chip_gen: v7x
topology: tpu7x:2x2x1
jax: 0.10.0
libtpu: 0.0.40
codegen_flags: <defaults>
</compile_context>

<pallas_src>
import numpy as np
import jax
import jax.numpy as jnp
from jax import lax
from jax.experimental import pallas as pl
from jax.experimental.pallas import tpu as pltpu


def _round_up(x, m):
    return (x + m - 1) // m * m


def init_params(key, n_features, n_hidden):
    """Deterministic init mirroring the module: xavier_uniform(fc_u), orthogonal(fc_h), relu gain."""
    gain = float(np.sqrt(2.0))  # nn.init.calculate_gain('relu')
    k_u, k_h, k_bu, k_bh = jax.random.split(key, 4)
    bound = gain * np.sqrt(6.0 / (n_features + n_hidden))
    w_u = jax.random.uniform(k_u, (n_hidden, n_features), jnp.float32, -bound, bound)
    a = jax.random.normal(k_h, (3 * n_hidden, n_hidden), jnp.float32)
    q, r = jnp.linalg.qr(a)
    q = q * jnp.sign(jnp.diag(r))[None, :]
    w_h = gain * q.T  # [n_hidden, 3*n_hidden]
    bu_bound = 1.0 / np.sqrt(n_features)
    b_u = jax.random.uniform(k_bu, (n_hidden,), jnp.float32, -bu_bound, bu_bound)
    bh_bound = 1.0 / np.sqrt(3 * n_hidden)
    b_h = jax.random.uniform(k_bh, (n_hidden,), jnp.float32, -bh_bound, bh_bound)
    return dict(w_u=w_u, b_u=b_u, w_h=w_h, b_h=b_h)


def _make_recnn_kernel(L, n_inners, level_off, Hp, MI, NK, Rp):
    """All tree-structure constants (level offsets, inner counts) are static."""

    def kernel(contents_ref, wu_ref, bu_ref, wh_ref, bh_ref, p_ref, o_ref, emb_ref):
        # fc_u + ReLU for ALL nodes of ALL levels in one MXU matmul.
        u = jnp.dot(contents_ref[...], wu_ref[...], preferred_element_type=jnp.float32)
        emb_ref[...] = jnp.maximum(u + bu_ref[...], 0.0)

        # fc_h weight blocks (h_L | h_R | u_k), hoisted out of the level loop.
        w1 = wh_ref[0 * Hp:1 * Hp, :]
        w2 = wh_ref[1 * Hp:2 * Hp, :]
        w3 = wh_ref[2 * Hp:3 * Hp, :]
        bh = bh_ref[...]
        row_ids = lax.broadcasted_iota(jnp.int32, (MI, Hp), 0)

        # Deepest level first.  All offsets / counts are compile-time ints, so
        # every slice below is a static, 8-aligned dense block access.
        for i in range(L):
            j = L - 1 - i
            ni = n_inners[j]
            if ni == 0:
                continue
            off = level_off[j]        # first row of level j   (multiple of 8)
            base = level_off[j + 1]   # first row of level j+1 (multiple of 8)

            # Child gather on the MXU: [P_L ; P_R] @ emb(level j+1).
            # One-hot columns >= n_nodes[j+1] are zero, so padded rows never leak.
            emb_next = emb_ref[base:base + NK, :]
            hlr = jnp.dot(p_ref[j], emb_next, preferred_element_type=jnp.float32)
            h_l = hlr[0:MI, :]
            h_r = hlr[MI:2 * MI, :]

            # u_k rows of this level (rows >= ni only feed discarded h rows).
            u_blk = emb_ref[off:off + MI, :]

            # fc_h + ReLU, as a sum of three (MI, Hp) x (Hp, Hp) matmuls
            # (equivalent to [h_L | h_R | u_k] @ W_h, without any concatenation).
            h = jnp.dot(h_l, w1, preferred_element_type=jnp.float32)
            h = h + jnp.dot(h_r, w2, preferred_element_type=jnp.float32)
            h = h + jnp.dot(u_blk, w3, preferred_element_type=jnp.float32)
            h = jnp.maximum(h + bh, 0.0)

            # Dense load-blend-store scatter: inner rows <- h, other rows unchanged.
            emb_ref[off:off + MI, :] = jnp.where(row_ids < ni, h, u_blk)

        # Roots (level 0, one per jet) live in rows [0, Rp).
        o_ref[...] = emb_ref[0:Rp, :]

    return kernel


def recnn_forward(params, levels_contents, children, n_inners, n_jets):
    """Fused forward pass of RecNN: one pallas_call over the whole tree recursion."""
    n_hidden, n_features = params["w_u"].shape
    L = len(levels_contents)
    n_nodes = [int(c.shape[0]) for c in levels_contents]
    n_inners = [int(x) for x in n_inners]
    n_roots = n_nodes[0]

    Hp = _round_up(n_hidden, 128)   # lane dim kept at 128: unmasked stores everywhere
    Fp = _round_up(n_features, 128)
    Rp = _round_up(n_roots, 8)
    MI = _round_up(max(n_inners + [1]), 8)                       # max inner nodes / level
    nk_raw = max([n_nodes[j + 1] for j in range(L - 1) if n_inners[j] > 0] + [1])
    NK = _round_up(nk_raw, 128)                                   # max child-level width

    # ---- host-side tree flattening (== the PyTorch `batch(jets)` glue) ----
    pad_nodes = [_round_up(n, 8) for n in n_nodes]                # 8-aligned level slots
    level_off = [0]
    for p in pad_nodes:
        level_off.append(level_off[-1] + p)
    TP = level_off[L] + max(MI, NK)                               # emb scratch rows

    contents_np = np.zeros((TP, Fp), np.float32)
    for j in range(L):
        c = np.asarray(levels_contents[j], np.float32)
        contents_np[level_off[j]:level_off[j] + n_nodes[j], :n_features] = c

    # Per-level stacked one-hot gather matrices [P_L ; P_R] (rows >= ni stay zero).
    pstack_np = np.zeros((L, 2 * MI, NK), np.float32)
    for j in range(L):
        ni = n_inners[j]
        if ni > 0:
            ch = np.asarray(children[j])[:ni].astype(np.int64)
            pstack_np[j, np.arange(ni), ch[:, 0]] = 1.0
            pstack_np[j, MI + np.arange(ni), ch[:, 1]] = 1.0

    # ---- pad params ONCE (zero padding is exact for linear + ReLU) ----
    w_u_t = params["w_u"].T   # [F, H]
    w_h_t = params["w_h"].T   # [3H, H]
    wu_p = jnp.zeros((Fp, Hp), jnp.float32).at[:n_features, :n_hidden].set(w_u_t)
    bu_p = jnp.zeros((1, Hp), jnp.float32).at[0, :n_hidden].set(params["b_u"])
    wh_p = jnp.zeros((3 * Hp, Hp), jnp.float32)
    for blk in range(3):  # h_L / h_R / u_k sub-blocks at 128-aligned row offsets
        wh_p = wh_p.at[blk * Hp:blk * Hp + n_hidden, :n_hidden].set(
            w_h_t[blk * n_hidden:(blk + 1) * n_hidden])
    bh_p = jnp.zeros((1, Hp), jnp.float32).at[0, :n_hidden].set(params["b_h"])

    contents_p = jnp.asarray(contents_np)
    pstack = jnp.asarray(pstack_np)

    kernel = _make_recnn_kernel(L, n_inners, level_off, Hp, MI, NK, Rp)

    # VMEM budget: inputs + output + persistent embedding scratch (all resident once).
    vmem_need = 4 * (contents_p.size + wu_p.size + bu_p.size + wh_p.size + bh_p.size
                     + pstack.size + Rp * Hp + TP * Hp)
    vmem_limit = int(min(max(2 * vmem_need + (4 << 20), 32 << 20), 64 << 20))

    vspec = pl.BlockSpec(memory_space=pltpu.MemorySpace.VMEM)
    out = pl.pallas_call(
        kernel,
        out_shape=jax.ShapeDtypeStruct((Rp, Hp), jnp.float32),
        in_specs=[vspec] * 6,
        out_specs=vspec,
        scratch_shapes=[pltpu.VMEM((TP, Hp), jnp.float32)],  # persistent node embeddings
        compiler_params=pltpu.CompilerParams(vmem_limit_bytes=vmem_limit),
    )(contents_p, wu_p, bu_p, wh_p, bh_p, pstack)
    # TODO(synk): for very wide levels / huge event batches, tile the gather matmul
    # along NK and stream `contents` from HBM per level (v7x has 64 MiB VMEM), and
    # split independent jets across the two v7x TensorCores (core_parallel).
    return out[:n_roots, :n_hidden].reshape(n_jets, -1)


def recnn_forward_ref(params, levels_contents, children, n_inners, n_jets):
    """Pure-JAX reference (same semantics as the PyTorch forward)."""
    w_u_t = params["w_u"].T
    w_h_t = params["w_h"].T
    L = len(levels_contents)
    embedding = None
    for i in range(L):
        j = L - 1 - i
        u_k = jnp.maximum(levels_contents[j] @ w_u_t + params["b_u"][None, :], 0.0)
        ni = int(n_inners[j])
        if ni > 0:
            ch = children[j]
            h_L = jnp.take(embedding, ch[:, 0], axis=0)
            h_R = jnp.take(embedding, ch[:, 1], axis=0)
            hin = jnp.concatenate([h_L, h_R, u_k[:ni]], axis=1)
            h = jnp.maximum(hin @ w_h_t + params["b_h"][None, :], 0.0)
            embedding = jnp.concatenate([h, u_k[ni:]], axis=0)
        else:
            embedding = u_k
    return embedding.reshape(n_jets, -1)


if __name__ == "__main__":
    n_features = 4
    n_hidden = 32
    n_jets = 2

    key = jax.random.PRNGKey(0)
    kp, k0, k1, k2 = jax.random.split(key, 4)
    params = init_params(kp, n_features, n_hidden)

    # Two jets, each a complete binary tree of depth 3 (1 root + 2 inner + 4 leaves),
    # batched per level (roots at level 0), matching the `batch(jets)` layout.
    levels_contents = [
        jax.random.normal(k0, (2, n_features), jnp.float32),  # 2 roots (inner)
        jax.random.normal(k1, (4, n_features), jnp.float32),  # 4 inner nodes
        jax.random.normal(k2, (8, n_features), jnp.float32),  # 8 leaves
    ]
    n_inners = [2, 4, 0]
    children = [
        jnp.array([[0, 1], [2, 3]], dtype=jnp.int32),                  # roots -> level-1 rows
        jnp.array([[0, 1], [2, 3], [4, 5], [6, 7]], dtype=jnp.int32),  # inner -> level-2 rows
        None,                                                          # leaves: no children
    ]

    out = recnn_forward(params, levels_contents, children, n_inners, n_jets)
    out = jax.block_until_ready(out)
    assert out.shape == (n_jets, n_hidden), out.shape

    ref = recnn_forward_ref(params, levels_contents, children, n_inners, n_jets)
    ref = jax.block_until_ready(ref)
    np.testing.assert_allclose(np.asarray(out), np.asarray(ref), rtol=2e-4, atol=2e-4)

    print("KERNEL_OK")
</pallas_src>

<mosaic_0001>
module attributes {stable_mosaic.version = 11 : i64} {
  func.func @kernel(%arg0: memref<152x128xf32, #tpu.memory_space<vmem>>, %arg1: memref<128x128xf32, #tpu.memory_space<vmem>>, %arg2: memref<1x128xf32, #tpu.memory_space<vmem>>, %arg3: memref<384x128xf32, #tpu.memory_space<vmem>>, %arg4: memref<1x128xf32, #tpu.memory_space<vmem>>, %arg5: memref<3x16x128xf32, #tpu.memory_space<vmem>>, %arg6: memref<8x128xf32, #tpu.memory_space<vmem>>, %arg7: memref<152x128xf32, #tpu.memory_space<vmem>>) attributes {dimension_semantics = [], scalar_prefetch = 0 : i64, scratch_operands = 1 : i64, tpu.core_type = #tpu.core_type<tc>} {
    %c0 = arith.constant 0 : index
    %c0_0 = arith.constant 0 : index
    %0 = vector.load %arg0[%c0, %c0_0] : memref<152x128xf32, #tpu.memory_space<vmem>>, vector<152x128xf32>
    %c0_1 = arith.constant 0 : index
    %c0_2 = arith.constant 0 : index
    %1 = vector.load %arg1[%c0_1, %c0_2] : memref<128x128xf32, #tpu.memory_space<vmem>>, vector<128x128xf32>
    %cst = arith.constant dense<0.000000e+00> : vector<152x128xf32>
    %2 = tpu.matmul %0, %1, %cst {dimension_numbers = #tpu.dot_dimension_numbers<[1], [0], [0], [1], [0, 0, 1, 1], [], []>} : vector<152x128xf32>, vector<128x128xf32>, vector<152x128xf32> -> vector<152x128xf32>
    %c0_3 = arith.constant 0 : index
    %c0_4 = arith.constant 0 : index
    %3 = vector.load %arg2[%c0_3, %c0_4] : memref<1x128xf32, #tpu.memory_space<vmem>>, vector<1x128xf32>
    %4 = vector.broadcast %3 : vector<1x128xf32> to vector<152x128xf32>
    %5 = arith.addf %2, %4 : vector<152x128xf32>
    %cst_5 = arith.constant 0.000000e+00 : f32
    %6 = vector.broadcast %cst_5 : f32 to vector<152x128xf32>
    %7 = arith.maximumf %5, %6 : vector<152x128xf32>
    %c0_6 = arith.constant 0 : index
    %c0_7 = arith.constant 0 : index
    %8 = vector.load %arg7[%c0_6, %c0_7] : memref<152x128xf32, #tpu.memory_space<vmem>>, vector<152x128xf32>
    tpu.vector_store %arg7[%c0_6, %c0_7], %7 {strides = array<i32>} : memref<152x128xf32, #tpu.memory_space<vmem>>, vector<152x128xf32>,
    %c0_8 = arith.constant 0 : index
    %c0_9 = arith.constant 0 : index
    %9 = vector.load %arg3[%c0_8, %c0_9] : memref<384x128xf32, #tpu.memory_space<vmem>>, vector<128x128xf32>
    %c128 = arith.constant 128 : index
    %c0_10 = arith.constant 0 : index
    %10 = vector.load %arg3[%c128, %c0_10] : memref<384x128xf32, #tpu.memory_space<vmem>>, vector<128x128xf32>
    %c256 = arith.constant 256 : index
    %c0_11 = arith.constant 0 : index
    %11 = vector.load %arg3[%c256, %c0_11] : memref<384x128xf32, #tpu.memory_space<vmem>>, vector<128x128xf32>
    %c0_12 = arith.constant 0 : index
    %c0_13 = arith.constant 0 : index
    %12 = vector.load %arg4[%c0_12, %c0_13] : memref<1x128xf32, #tpu.memory_space<vmem>>, vector<1x128xf32>
    %13 = tpu.iota {dimensions = array<i32: 0>} : vector<8x128xi32>
    %c16 = arith.constant 16 : index
    %c0_14 = arith.constant 0 : index
    %14 = vector.load %arg7[%c16, %c0_14] : memref<152x128xf32, #tpu.memory_space<vmem>>, vector<128x128xf32>
    %c1 = arith.constant 1 : index
    %c0_15 = arith.constant 0 : index
    %c0_16 = arith.constant 0 : index
    %15 = vector.load %arg5[%c1, %c0_15, %c0_16] : memref<3x16x128xf32, #tpu.memory_space<vmem>>, vector<1x16x128xf32>
    %16 = vector.shape_cast %15 : vector<1x16x128xf32> to vector<16x128xf32>
    %cst_17 = arith.constant dense<0.000000e+00> : vector<16x128xf32>
    %17 = tpu.matmul %16, %14, %cst_17 {dimension_numbers = #tpu.dot_dimension_numbers<[1], [0], [0], [1], [0, 0, 1, 1], [], []>} : vector<16x128xf32>, vector<128x128xf32>, vector<16x128xf32> -> vector<16x128xf32>
    %18 = vector.extract_strided_slice %17 {offsets = [0, 0], sizes = [8, 128], strides = [1, 1]} : vector<16x128xf32> to vector<8x128xf32>
    %19 = vector.extract_strided_slice %17 {offsets = [8, 0], sizes = [8, 128], strides = [1, 1]} : vector<16x128xf32> to vector<8x128xf32>
    %c8 = arith.constant 8 : index
    %c0_18 = arith.constant 0 : index
    %20 = vector.load %arg7[%c8, %c0_18] : memref<152x128xf32, #tpu.memory_space<vmem>>, vector<8x128xf32>
    %cst_19 = arith.constant dense<0.000000e+00> : vector<8x128xf32>
    %21 = tpu.matmul %18, %9, %cst_19 {dimension_numbers = #tpu.dot_dimension_numbers<[1], [0], [0], [1], [0, 0, 1, 1], [], []>} : vector<8x128xf32>, vector<128x128xf32>, vector<8x128xf32> -> vector<8x128xf32>
    %cst_20 = arith.constant dense<0.000000e+00> : vector<8x128xf32>
    %22 = tpu.matmul %19, %10, %cst_20 {dimension_numbers = #tpu.dot_dimension_numbers<[1], [0], [0], [1], [0, 0, 1, 1], [], []>} : vector<8x128xf32>, vector<128x128xf32>, vector<8x128xf32> -> vector<8x128xf32>
    %23 = arith.addf %21, %22 : vector<8x128xf32>
    %cst_21 = arith.constant dense<0.000000e+00> : vector<8x128xf32>
    %24 = tpu.matmul %20, %11, %cst_21 {dimension_numbers = #tpu.dot_dimension_numbers<[1], [0], [0], [1], [0, 0, 1, 1], [], []>} : vector<8x128xf32>, vector<128x128xf32>, vector<8x128xf32> -> vector<8x128xf32>
    %25 = arith.addf %23, %24 : vector<8x128xf32>
    %26 = vector.broadcast %12 : vector<1x128xf32> to vector<8x128xf32>
    %27 = arith.addf %25, %26 : vector<8x128xf32>
    %cst_22 = arith.constant 0.000000e+00 : f32
    %28 = vector.broadcast %cst_22 : f32 to vector<8x128xf32>
    %29 = arith.maximumf %27, %28 : vector<8x128xf32>
    %c4_i32 = arith.constant 4 : i32
    %30 = vector.broadcast %c4_i32 : i32 to vector<8x128xi32>
    %31 = arith.cmpi slt, %13, %30 : vector<8x128xi32>
    %32 = arith.select %31, %29, %20 : vector<8x128xi1>, vector<8x128xf32>
    %c8_23 = arith.constant 8 : index
    %c0_24 = arith.constant 0 : index
    %33 = vector.load %arg7[%c8_23, %c0_24] : memref<152x128xf32, #tpu.memory_space<vmem>>, vector<8x128xf32>
    tpu.vector_store %arg7[%c8_23, %c0_24], %32 {strides = array<i32>} : memref<152x128xf32, #tpu.memory_space<vmem>>, vector<8x128xf32>,
    %c8_25 = arith.constant 8 : index
    %c0_26 = arith.constant 0 : index
    %34 = vector.load %arg7[%c8_25, %c0_26] : memref<152x128xf32, #tpu.memory_space<vmem>>, vector<128x128xf32>
    %c0_27 = arith.constant 0 : index
    %c0_28 = arith.constant 0 : index
    %c0_29 = arith.constant 0 : index
    %35 = vector.load %arg5[%c0_27, %c0_28, %c0_29] : memref<3x16x128xf32, #tpu.memory_space<vmem>>, vector<1x16x128xf32>
    %36 = vector.shape_cast %35 : vector<1x16x128xf32> to vector<16x128xf32>
    %cst_30 = arith.constant dense<0.000000e+00> : vector<16x128xf32>
    %37 = tpu.matmul %36, %34, %cst_30 {dimension_numbers = #tpu.dot_dimension_numbers<[1], [0], [0], [1], [0, 0, 1, 1], [], []>} : vector<16x128xf32>, vector<128x128xf32>, vector<16x128xf32> -> vector<16x128xf32>
    %38 = vector.extract_strided_slice %37 {offsets = [0, 0], sizes = [8, 128], strides = [1, 1]} : vector<16x128xf32> to vector<8x128xf32>
    %39 = vector.extract_strided_slice %37 {offsets = [8, 0], sizes = [8, 128], strides = [1, 1]} : vector<16x128xf32> to vector<8x128xf32>
    %c0_31 = arith.constant 0 : index
    %c0_32 = arith.constant 0 : index
    %40 = vector.load %arg7[%c0_31, %c0_32] : memref<152x128xf32, #tpu.memory_space<vmem>>, vector<8x128xf32>
    %cst_33 = arith.constant dense<0.000000e+00> : vector<8x128xf32>
    %41 = tpu.matmul %38, %9, %cst_33 {dimension_numbers = #tpu.dot_dimension_numbers<[1], [0], [0], [1], [0, 0, 1, 1], [], []>} : vector<8x128xf32>, vector<128x128xf32>, vector<8x128xf32> -> vector<8x128xf32>
    %cst_34 = arith.constant dense<0.000000e+00> : vector<8x128xf32>
    %42 = tpu.matmul %39, %10, %cst_34 {dimension_numbers = #tpu.dot_dimension_numbers<[1], [0], [0], [1], [0, 0, 1, 1], [], []>} : vector<8x128xf32>, vector<128x128xf32>, vector<8x128xf32> -> vector<8x128xf32>
    %43 = arith.addf %41, %42 : vector<8x128xf32>
    %cst_35 = arith.constant dense<0.000000e+00> : vector<8x128xf32>
    %44 = tpu.matmul %40, %11, %cst_35 {dimension_numbers = #tpu.dot_dimension_numbers<[1], [0], [0], [1], [0, 0, 1, 1], [], []>} : vector<8x128xf32>, vector<128x128xf32>, vector<8x128xf32> -> vector<8x128xf32>
    %45 = arith.addf %43, %44 : vector<8x128xf32>
    %46 = vector.broadcast %12 : vector<1x128xf32> to vector<8x128xf32>
    %47 = arith.addf %45, %46 : vector<8x128xf32>
    %cst_36 = arith.constant 0.000000e+00 : f32
    %48 = vector.broadcast %cst_36 : f32 to vector<8x128xf32>
    %49 = arith.maximumf %47, %48 : vector<8x128xf32>
    %c2_i32 = arith.constant 2 : i32
    %50 = vector.broadcast %c2_i32 : i32 to vector<8x128xi32>
    %51 = arith.cmpi slt, %13, %50 : vector<8x128xi32>
    %52 = arith.select %51, %49, %40 : vector<8x128xi1>, vector<8x128xf32>
    %c0_37 = arith.constant 0 : index
    %c0_38 = arith.constant 0 : index
    %53 = vector.load %arg7[%c0_37, %c0_38] : memref<152x128xf32, #tpu.memory_space<vmem>>, vector<8x128xf32>
    tpu.vector_store %arg7[%c0_37, %c0_38], %52 {strides = array<i32>} : memref<152x128xf32, #tpu.memory_space<vmem>>, vector<8x128xf32>,
    %c0_39 = arith.constant 0 : index
    %c0_40 = arith.constant 0 : index
    %54 = vector.load %arg7[%c0_39, %c0_40] : memref<152x128xf32, #tpu.memory_space<vmem>>, vector<8x128xf32>
    %c0_41 = arith.constant 0 : index
    %c0_42 = arith.constant 0 : index
    %55 = vector.load %arg6[%c0_41, %c0_42] : memref<8x128xf32, #tpu.memory_space<vmem>>, vector<8x128xf32>
    tpu.vector_store %arg6[%c0_41, %c0_42], %54 {strides = array<i32>} : memref<8x128xf32, #tpu.memory_space<vmem>>, vector<8x128xf32>,
    return
  }
}

</mosaic_0001>

<llo_original>
// kernel: tpu_custom_call.1
$region0: #{tpu_custom_call.1}
  #allocation0 [shape = 'u32[]', space=smem, size = 0x4, offset = 0x4, fixed_abs, tag = 'smem constant byte address 0x4 - core index']
  #allocation1 [shape = 'u32[144,128]{1,0:T(1,128)}', space=vmem, size = 0x12000, scoped, tag = 'internal scratch']
  #allocation2 [shape = 'f32[152,128]{1,0:T(8,128)}', space=vmem, size = 0x13000, scoped, tag = 'scratch operand']
  %s0 = inlined_call_operand.hbm [shape: f32[152,128], index: 0, kind: input, shape index: {}]
  %s1 = inlined_call_operand.hbm [shape: f32[128,128], index: 1, kind: input, shape index: {}]
  %s2 = inlined_call_operand.vmem [shape: f32[1,128], index: 2, kind: input, shape index: {}]
  %s3 = inlined_call_operand.hbm [shape: f32[384,128], index: 3, kind: input, shape index: {}]
  %s4 = inlined_call_operand.vmem [shape: f32[1,128], index: 4, kind: input, shape index: {}]
  %s5 = inlined_call_operand.hbm [shape: f32[3,16,128], index: 5, kind: input, shape index: {}]
  %s6 = inlined_call_operand.hbm [shape: f32[8,128], index: 6, kind: output, shape index: {}]
  %s7 = sld [smem:[#allocation0]]
  $region50: #{tpu_custom_call.1} parent=0
    _
  %s9 = ssub.s32 1, %s7
  %s10 = scalar_select 0, %s9, %s7
  $region1: #{tpu_custom_call.1} parent=0
    #allocation3 [shape = 'u8[77824]{0}', space=vmem, size = 0x13000, scoped, tag = 'input window, operand 0, single buffered']
    #allocation4 [shape = 's32[1]{0}', space=sflag, size = 0x4, scoped, tag = 'scoped memory for tpu_custom_call.1']
    #allocation5 [shape = 's32[1]{0}', space=sflag, size = 0x4, scoped, tag = 'scoped memory for tpu_custom_call.1']
    #allocation6 [shape = 'u8[65536]{0}', space=vmem, size = 0x10000, scoped, tag = 'input window, operand 1, single buffered']
    #allocation7 [shape = 's32[1]{0}', space=sflag, size = 0x4, scoped, tag = 'scoped memory for tpu_custom_call.1']
    #allocation8 [shape = 'u8[196608]{0}', space=vmem, size = 0x30000, scoped, tag = 'input window, operand 3, single buffered']
    #allocation9 [shape = 'u8[24576]{0}', space=vmem, size = 0x6000, scoped, tag = 'input window, operand 5, single buffered']
    #allocation10 [shape = 's32[1]{0}', space=sflag, size = 0x4, scoped, tag = 'scoped memory for tpu_custom_call.1']
    #allocation11 [shape = 'u8[4096]{0}', space=vmem, size = 0x1000, scoped, tag = 'output window, operand 0, single buffered']
    %11 = vsyncpa [#allocation4], 0
    %12 = vsyncpa [#allocation7], 0
    %13 = vsyncpa [#allocation10], 0
    %14 = vsyncpa [#allocation5], 0
    // Predicated region
    $region2: #{tpu_custom_call.1} parent=1 // pred_check
      _
    $region3: #{tpu_custom_call.1} parent=1 // pred_check_branch
      %16 = sbr.rel (0) target = $region5
    $region4: #{tpu_custom_call.1} parent=1 // pred_region
      %s18 = ssub.s32 2432, 2432
      %19 = vsyncadd [#allocation4], %s18
      %s20 = sshll.u32 [#allocation3], 4
      %s21 = int_to_ptr.vmem [resolvable:$true] %s20
      %26 = dma.hbm_to_vmem [thread:$0]  %s0, 2432, %s21, [#allocation4], 128, 128, 8
    $region5: #{tpu_custom_call.1} parent=1 // pred_fallthru
      _
    // Predicated region
    $region6: #{tpu_custom_call.1} parent=1 // pred_check
      _
    $region7: #{tpu_custom_call.1} parent=1 // pred_check_branch
      %28 = sbr.rel (0) target = $region9
    $region8: #{tpu_custom_call.1} parent=1 // pred_region
      %s30 = ssub.s32 2048, 2048
      %31 = vsyncadd [#allocation7], %s30
      %s32 = sshll.u32 [#allocation6], 4
      %s33 = int_to_ptr.vmem [resolvable:$true] %s32
      %38 = dma.hbm_to_vmem [thread:$0]  %s1, 2048, %s33, [#allocation7], 128, 128, 8
    $region9: #{tpu_custom_call.1} parent=1 // pred_fallthru
      _
    // Predicated region
    $region10: #{tpu_custom_call.1} parent=1 // pred_check
      _
    $region11: #{tpu_custom_call.1} parent=1 // pred_check_branch
      %40 = sbr.rel (0) target = $region13
    $region12: #{tpu_custom_call.1} parent=1 // pred_region
      _
    $region13: #{tpu_custom_call.1} parent=1 // pred_fallthru
      _
    // Predicated region
    $region14: #{tpu_custom_call.1} parent=1 // pred_check
      _
    $region15: #{tpu_custom_call.1} parent=1 // pred_check_branch
      %42 = sbr.rel (0) target = $region17
    $region16: #{tpu_custom_call.1} parent=1 // pred_region
      %s44 = ssub.s32 6144, 6144
      %45 = vsyncadd [#allocation7], %s44
      %s46 = sshll.u32 [#allocation8], 4
      %s47 = int_to_ptr.vmem [resolvable:$true] %s46
      %52 = dma.hbm_to_vmem [thread:$0]  %s3, 6144, %s47, [#allocation7], 128, 128, 8
    $region17: #{tpu_custom_call.1} parent=1 // pred_fallthru
      _
    // Predicated region
    $region18: #{tpu_custom_call.1} parent=1 // pred_check
      _
    $region19: #{tpu_custom_call.1} parent=1 // pred_check_branch
      %54 = sbr.rel (0) target = $region21
    $region20: #{tpu_custom_call.1} parent=1 // pred_region
      _
    $region21: #{tpu_custom_call.1} parent=1 // pred_fallthru
      _
    // Predicated region
    $region22: #{tpu_custom_call.1} parent=1 // pred_check
      _
    $region23: #{tpu_custom_call.1} parent=1 // pred_check_branch
      %56 = sbr.rel (0) target = $region25
    $region24: #{tpu_custom_call.1} parent=1 // pred_region
      %s58 = ssub.s32 768, 768
      %59 = vsyncadd [#allocation10], %s58
      %s60 = sshll.u32 [#allocation9], 4
      %s61 = int_to_ptr.vmem [resolvable:$true] %s60
      %66 = dma.hbm_to_vmem [thread:$0]  %s5, 768, %s61, [#allocation10], 128, 128, 8
    $region25: #{tpu_custom_call.1} parent=1 // pred_fallthru
      _
    // Predicated region
    $region26: #{tpu_custom_call.1} parent=1 // pred_check
      _
    $region27: #{tpu_custom_call.1} parent=1 // pred_check_branch
      %68 = sbr.rel (0) target = $region29
    $region28: #{tpu_custom_call.1} parent=1 // pred_region
      %69 = dma.done [#allocation4], 2432
    $region29: #{tpu_custom_call.1} parent=1 // pred_fallthru
      _
    // Predicated region
    $region30: #{tpu_custom_call.1} parent=1 // pred_check
      _
    $region31: #{tpu_custom_call.1} parent=1 // pred_check_branch
      %71 = sbr.rel (0) target = $region33
    $region32: #{tpu_custom_call.1} parent=1 // pred_region
      %72 = dma.done [#allocation7], 2048
    $region33: #{tpu_custom_call.1} parent=1 // pred_fallthru
      _
    // Predicated region
    $region34: #{tpu_custom_call.1} parent=1 // pred_check
      _
    $region35: #{tpu_custom_call.1} parent=1 // pred_check_branch
      %74 = sbr.rel (0) target = $region37
    $region36: #{tpu_custom_call.1} parent=1 // pred_region
      %75 = dma.done [#allocation7], 6144
    $region37: #{tpu_custom_call.1} parent=1 // pred_fallthru
      _
    // Predicated region
    $region38: #{tpu_custom_call.1} parent=1 // pred_check
      _
    $region39: #{tpu_custom_call.1} parent=1 // pred_check_branch
      %77 = sbr.rel (0) target = $region41
    $region40: #{tpu_custom_call.1} parent=1 // pred_region
      %78 = dma.done [#allocation10], 768
    $region41: #{tpu_custom_call.1} parent=1 // pred_fallthru
      _
    %v79 = vld [vmem:[#allocation3] sm:$0xff]
    %v80 = vld [vmem:[#allocation3 + $0x8] sm:$0xff]
    %v81 = vld [vmem:[#allocation3 + $0x10] sm:$0xff]
    %v82 = vld [vmem:[#allocation3 + $0x18] sm:$0xff]
    %v83 = vld [vmem:[#allocation3 + $0x20] sm:$0xff]
    %v84 = vld [vmem:[#allocation3 + $0x28] sm:$0xff]
    %v85 = vld [vmem:[#allocation3 + $0x30] sm:$0xff]
    %v86 = vld [vmem:[#allocation3 + $0x38] sm:$0xff]
    %v87 = vld [vmem:[#allocation3 + $0x40] sm:$0xff]
    %v88 = vld [vmem:[#allocation3 + $0x48] sm:$0xff]
    %v89 = vld [vmem:[#allocation3 + $0x50] sm:$0xff]
    %v90 = vld [vmem:[#allocation3 + $0x58] sm:$0xff]
    %v91 = vld [vmem:[#allocation3 + $0x60] sm:$0xff]
    %v92 = vld [vmem:[#allocation3 + $0x68] sm:$0xff]
    %v93 = vld [vmem:[#allocation3 + $0x70] sm:$0xff]
    %v94 = vld [vmem:[#allocation3 + $0x78] sm:$0xff]
    %v95 = vld [vmem:[#allocation3 + $0x80] sm:$0xff]
    %v96 = vld [vmem:[#allocation3 + $0x88] sm:$0xff]
    %v97 = vld [vmem:[#allocation3 + $0x90] sm:$0xff]
    %v98 = vld [vmem:[#allocation6] sm:$0xff]
    %v99 = vld [vmem:[#allocation6 + $0x8] sm:$0xff]
    %v100 = vld [vmem:[#allocation6 + $0x10] sm:$0xff]
    %v101 = vld [vmem:[#allocation6 + $0x18] sm:$0xff]
    %v102 = vld [vmem:[#allocation6 + $0x20] sm:$0xff]
    %v103 = vld [vmem:[#allocation6 + $0x28] sm:$0xff]
    %v104 = vld [vmem:[#allocation6 + $0x30] sm:$0xff]
    %v105 = vld [vmem:[#allocation6 + $0x38] sm:$0xff]
    %v106 = vld [vmem:[#allocation6 + $0x40] sm:$0xff]
    %v107 = vld [vmem:[#allocation6 + $0x48] sm:$0xff]
    %v108 = vld [vmem:[#allocation6 + $0x50] sm:$0xff]
    %v109 = vld [vmem:[#allocation6 + $0x58] sm:$0xff]
    %v110 = vld [vmem:[#allocation6 + $0x60] sm:$0xff]
    %v111 = vld [vmem:[#allocation6 + $0x68] sm:$0xff]
    %v112 = vld [vmem:[#allocation6 + $0x70] sm:$0xff]
    %v113 = vld [vmem:[#allocation6 + $0x78] sm:$0xff]
    %v114 = vld [vmem:[%s2] sm:$0x1]
    %v116 = vlaneseq
    %v117 = vshrl.u32 %v116, 7
    %v118 = vsub.s32 0, %v117
    %v119 = vrot.slane %v114, %v118
    %121 = vmatprep.subr.mxu0 0.0
    %122 = vmatpush1.msra.mxu0 %v98
    %123 = vmatprep.subr.mxu0 0.0
    %124 = vmatpush1.msra.mxu0 %v99
    %125 = vmatprep.subr.mxu0 0.0
    %126 = vmatpush1.msra.mxu0 %v100
    %127 = vmatprep.subr.mxu0 0.0
    %128 = vmatpush1.msra.mxu0 %v101
    %129 = vmatprep.subr.mxu0 0.0
    %130 = vmatpush1.msra.mxu0 %v102
    %131 = vmatprep.subr.mxu0 0.0
    %132 = vmatpush1.msra.mxu0 %v103
    %133 = vmatprep.subr.mxu0 0.0
    %134 = vmatpush1.msra.mxu0 %v104
    %135 = vmatprep.subr.mxu0 0.0
    %136 = vmatpush1.msra.mxu0 %v105
    %137 = vmatprep.subr.mxu0 0.0
    %138 = vmatpush1.msra.mxu0 %v106
    %139 = vmatprep.subr.mxu0 0.0
    %140 = vmatpush1.msra.mxu0 %v107
    %141 = vmatprep.subr.mxu0 0.0
    %142 = vmatpush1.msra.mxu0 %v108
    %143 = vmatprep.subr.mxu0 0.0
    %144 = vmatpush1.msra.mxu0 %v109
    %145 = vmatprep.subr.mxu0 0.0
    %146 = vmatpush1.msra.mxu0 %v110
    %147 = vmatprep.subr.mxu0 0.0
    %148 = vmatpush1.msra.mxu0 %v111
    %149 = vmatprep.subr.mxu0 0.0
    %150 = vmatpush1.msra.mxu0 %v112
    %151 = vmatprep.subr.mxu0 0.0
    %152 = vmatpush1.msra.mxu0 %v113
    %153 = vmatprep.subr.mxu0 0.0
    %154 = vmatpush1.msra.mxu0 0.0
    %155 = vmatprep.subr.mxu0 0.0
    %156 = vmatpush1.msra.mxu0 0.0
    %157 = vmatprep.subr.mxu0 0.0
    %158 = vmatpush1.msra.mxu0 0.0
    %159 = vmatprep.subr.mxu0 0.0
    %160 = vmatpush1.msra.mxu0 0.0
    %161 = vmatprep.subr.mxu0 0.0
    %162 = vmatpush1.msra.mxu0 0.0
    %163 = vmatprep.subr.mxu0 0.0
    %164 = vmatpush1.msra.mxu0 0.0
    %165 = vmatprep.subr.mxu0 0.0
    %166 = vmatpush1.msra.mxu0 0.0
    %167 = vmatprep.subr.mxu0 0.0
    %168 = vmatpush1.msra.mxu0 0.0
    %169 = vmatprep.subr.mxu0 0.0
    %170 = vmatpush1.msra.mxu0 0.0
    %171 = vmatprep.subr.mxu0 0.0
    %172 = vmatpush1.msra.mxu0 0.0
    %173 = vmatprep.subr.mxu0 0.0
    %174 = vmatpush1.msra.mxu0 0.0
    %175 = vmatprep.subr.mxu0 0.0
    %176 = vmatpush1.msra.mxu0 0.0
    %177 = vmatprep.subr.mxu0 0.0
    %178 = vmatpush1.msra.mxu0 0.0
    %179 = vmatprep.subr.mxu0 0.0
    %180 = vmatpush1.msra.mxu0 0.0
    %181 = vmatprep.subr.mxu0 0.0
    %182 = vmatpush1.msra.mxu0 0.0
    %183 = vmatprep.subr.mxu0 0.0
    %184 = vmatpush1.msra.mxu0 0.0
    %185 = vmatprep.mubr.f32.mxu0 0.0
    %186 = vmatmul.mubr.f32.gmra.mrb[0].mxu0 %v79
    %v187 = vpop.f32.mrb[0].mxu0
    %v188 = vadd.f32 %v119, %v187
    %v189 = vpop.f32.mrb[0].mxu0
    %190 = vmatprep.mubr.f32.mxu0 0.0
    %191 = vmatmul.mubr.f32.gmra.mrb[0].mxu0 %v80
    %v192 = vpop.f32.mrb[0].mxu0
    %v193 = vadd.f32 %v119, %v192
    %v194 = vpop.f32.mrb[0].mxu0
    %195 = vmatprep.mubr.f32.mxu0 0.0
    %196 = vmatmul.mubr.f32.gmra.mrb[0].mxu0 %v81
    %v197 = vpop.f32.mrb[0].mxu0
    %v198 = vadd.f32 %v119, %v197
    %v199 = vpop.f32.mrb[0].mxu0
    %200 = vmatprep.mubr.f32.mxu0 0.0
    %201 = vmatmul.mubr.f32.gmra.mrb[0].mxu0 %v82
    %v202 = vpop.f32.mrb[0].mxu0
    %v203 = vadd.f32 %v119, %v202
    %v204 = vpop.f32.mrb[0].mxu0
    %205 = vmatprep.mubr.f32.mxu0 0.0
    %206 = vmatmul.mubr.f32.gmra.mrb[0].mxu0 %v83
    %v207 = vpop.f32.mrb[0].mxu0
    %v208 = vadd.f32 %v119, %v207
    %v209 = vpop.f32.mrb[0].mxu0
    %210 = vmatprep.mubr.f32.mxu0 0.0
    %211 = vmatmul.mubr.f32.gmra.mrb[0].mxu0 %v84
    %v212 = vpop.f32.mrb[0].mxu0
    %v213 = vadd.f32 %v119, %v212
    %v214 = vpop.f32.mrb[0].mxu0
    %215 = vmatprep.mubr.f32.mxu0 0.0
    %216 = vmatmul.mubr.f32.gmra.mrb[0].mxu0 %v85
    %v217 = vpop.f32.mrb[0].mxu0
    %v218 = vadd.f32 %v119, %v217
    %v219 = vpop.f32.mrb[0].mxu0
    %220 = vmatprep.mubr.f32.mxu0 0.0
    %221 = vmatmul.mubr.f32.gmra.mrb[0].mxu0 %v86
    %v222 = vpop.f32.mrb[0].mxu0
    %v223 = vadd.f32 %v119, %v222
    %v224 = vpop.f32.mrb[0].mxu0
    %225 = vmatprep.mubr.f32.mxu0 0.0
    %226 = vmatmul.mubr.f32.gmra.mrb[0].mxu0 %v87
    %v227 = vpop.f32.mrb[0].mxu0
    %v228 = vadd.f32 %v119, %v227
    %v229 = vpop.f32.mrb[0].mxu0
    %230 = vmatprep.mubr.f32.mxu0 0.0
    %231 = vmatmul.mubr.f32.gmra.mrb[0].mxu0 %v88
    %v232 = vpop.f32.mrb[0].mxu0
    %v233 = vadd.f32 %v119, %v232
    %v234 = vpop.f32.mrb[0].mxu0
    %235 = vmatprep.mubr.f32.mxu0 0.0
    %236 = vmatmul.mubr.f32.gmra.mrb[0].mxu0 %v89
    %v237 = vpop.f32.mrb[0].mxu0
    %v238 = vadd.f32 %v119, %v237
    %v239 = vpop.f32.mrb[0].mxu0
    %240 = vmatprep.mubr.f32.mxu0 0.0
    %241 = vmatmul.mubr.f32.gmra.mrb[0].mxu0 %v90
    %v242 = vpop.f32.mrb[0].mxu0
    %v243 = vadd.f32 %v119, %v242
    %v244 = vpop.f32.mrb[0].mxu0
    %245 = vmatprep.mubr.f32.mxu0 0.0
    %246 = vmatmul.mubr.f32.gmra.mrb[0].mxu0 %v91
    %v247 = vpop.f32.mrb[0].mxu0
    %v248 = vadd.f32 %v119, %v247
    %v249 = vpop.f32.mrb[0].mxu0
    %250 = vmatprep.mubr.f32.mxu0 0.0
    %251 = vmatmul.mubr.f32.gmra.mrb[0].mxu0 %v92
    %v252 = vpop.f32.mrb[0].mxu0
    %v253 = vadd.f32 %v119, %v252
    %v254 = vpop.f32.mrb[0].mxu0
    %255 = vmatprep.mubr.f32.mxu0 0.0
    %256 = vmatmul.mubr.f32.gmra.mrb[0].mxu0 %v93
    %v257 = vpop.f32.mrb[0].mxu0
    %v258 = vadd.f32 %v119, %v257
    %v259 = vpop.f32.mrb[0].mxu0
    %260 = vmatprep.mubr.f32.mxu0 0.0
    %261 = vmatmul.mubr.f32.gmra.mrb[0].mxu0 %v94
    %v262 = vpop.f32.mrb[0].mxu0
    %v263 = vadd.f32 %v119, %v262
    %v264 = vpop.f32.mrb[0].mxu0
    %265 = vmatprep.mubr.f32.mxu0 0.0
    %266 = vmatmul.mubr.f32.gmra.mrb[0].mxu0 %v95
    %v267 = vpop.f32.mrb[0].mxu0
    %v268 = vadd.f32 %v119, %v267
    %v269 = vpop.f32.mrb[0].mxu0
    %270 = vmatprep.mubr.f32.mxu0 0.0
    %271 = vmatmul.mubr.f32.gmra.mrb[0].mxu0 %v96
    %v272 = vpop.f32.mrb[0].mxu0
    %v273 = vadd.f32 %v119, %v272
    %v274 = vpop.f32.mrb[0].mxu0
    %275 = vmatprep.mubr.f32.mxu0 0.0
    %276 = vmatmul.mubr.f32.gmra.mrb[0].mxu0 %v97
    %v277 = vpop.f32.mrb[0].mxu0
    %v278 = vadd.f32 %v119, %v277
    %v279 = vpop.f32.mrb[0].mxu0
    %280 = vdwg.mxu0
    %v281 = vmax.f32 %v188, 0.0
    %v282 = vmax.f32 %v193, 0.0
    %v283 = vmax.f32 %v198, 0.0
    %v284 = vmax.f32 %v203, 0.0
    %v285 = vmax.f32 %v208, 0.0
    %v286 = vmax.f32 %v213, 0.0
    %v287 = vmax.f32 %v218, 0.0
    %v288 = vmax.f32 %v223, 0.0
    %v289 = vmax.f32 %v228, 0.0
    %v290 = vmax.f32 %v233, 0.0
    %v291 = vmax.f32 %v238, 0.0
    %v292 = vmax.f32 %v243, 0.0
    %v293 = vmax.f32 %v248, 0.0
    %v294 = vmax.f32 %v253, 0.0
    %v295 = vmax.f32 %v258, 0.0
    %v296 = vmax.f32 %v263, 0.0
    %v297 = vmax.f32 %v268, 0.0
    %v298 = vmax.f32 %v273, 0.0
    %v299 = vmax.f32 %v278, 0.0
    %300 = vst [vmem:[#allocation2] sm:$0xff] %v281
    %301 = vst [vmem:[#allocation2 + $0x8] sm:$0xff] %v282
    %302 = vst [vmem:[#allocation2 + $0x10] sm:$0xff] %v283
    %303 = vst [vmem:[#allocation2 + $0x18] sm:$0xff] %v284
    %304 = vst [vmem:[#allocation2 + $0x20] sm:$0xff] %v285
    %305 = vst [vmem:[#allocation2 + $0x28] sm:$0xff] %v286
    %306 = vst [vmem:[#allocation2 + $0x30] sm:$0xff] %v287
    %307 = vst [vmem:[#allocation2 + $0x38] sm:$0xff] %v288
    %308 = vst [vmem:[#allocation2 + $0x40] sm:$0xff] %v289
    %309 = vst [vmem:[#allocation2 + $0x48] sm:$0xff] %v290
    %310 = vst [vmem:[#allocation2 + $0x50] sm:$0xff] %v291
    %311 = vst [vmem:[#allocation2 + $0x58] sm:$0xff] %v292
    %312 = vst [vmem:[#allocation2 + $0x60] sm:$0xff] %v293
    %313 = vst [vmem:[#allocation2 + $0x68] sm:$0xff] %v294
    %314 = vst [vmem:[#allocation2 + $0x70] sm:$0xff] %v295
    %315 = vst [vmem:[#allocation2 + $0x78] sm:$0xff] %v296
    %316 = vst [vmem:[#allocation2 + $0x80] sm:$0xff] %v297
    %317 = vst [vmem:[#allocation2 + $0x88] sm:$0xff] %v298
    %318 = vst [vmem:[#allocation2 + $0x90] sm:$0xff] %v299
    %v319 = vld [vmem:[#allocation8] sm:$0xff]
    %v320 = vld [vmem:[#allocation8 + $0x8] sm:$0xff]
    %v321 = vld [vmem:[#allocation8 + $0x10] sm:$0xff]
    %v322 = vld [vmem:[#allocation8 + $0x18] sm:$0xff]
    %v323 = vld [vmem:[#allocation8 + $0x20] sm:$0xff]
    %v324 = vld [vmem:[#allocation8 + $0x28] sm:$0xff]
    %v325 = vld [vmem:[#allocation8 + $0x30] sm:$0xff]
    %v326 = vld [vmem:[#allocation8 + $0x38] sm:$0xff]
    %v327 = vld [vmem:[#allocation8 + $0x40] sm:$0xff]
    %v328 = vld [vmem:[#allocation8 + $0x48] sm:$0xff]
    %v329 = vld [vmem:[#allocation8 + $0x50] sm:$0xff]
    %v330 = vld [vmem:[#allocation8 + $0x58] sm:$0xff]
    %v331 = vld [vmem:[#allocation8 + $0x60] sm:$0xff]
    %v332 = vld [vmem:[#allocation8 + $0x68] sm:$0xff]
    %v333 = vld [vmem:[#allocation8 + $0x70] sm:$0xff]
    %v334 = vld [vmem:[#allocation8 + $0x78] sm:$0xff]
    %v335 = vld [vmem:[#allocation8 + $0x80] sm:$0xff]
    %v336 = vld [vmem:[#allocation8 + $0x88] sm:$0xff]
    %v337 = vld [vmem:[#allocation8 + $0x90] sm:$0xff]
    %v338 = vld [vmem:[#allocation8 + $0x98] sm:$0xff]
    %v339 = vld [vmem:[#allocation8 + $0xa0] sm:$0xff]
    %v340 = vld [vmem:[#allocation8 + $0xa8] sm:$0xff]
    %v341 = vld [vmem:[#allocation8 + $0xb0] sm:$0xff]
    %v342 = vld [vmem:[#allocation8 + $0xb8] sm:$0xff]
    %v343 = vld [vmem:[#allocation8 + $0xc0] sm:$0xff]
    %v344 = vld [vmem:[#allocation8 + $0xc8] sm:$0xff]
    %v345 = vld [vmem:[#allocation8 + $0xd0] sm:$0xff]
    %v346 = vld [vmem:[#allocation8 + $0xd8] sm:$0xff]
    %v347 = vld [vmem:[#allocation8 + $0xe0] sm:$0xff]
    %v348 = vld [vmem:[#allocation8 + $0xe8] sm:$0xff]
    %v349 = vld [vmem:[#allocation8 + $0xf0] sm:$0xff]
    %v350 = vld [vmem:[#allocation8 + $0xf8] sm:$0xff]
    %v351 = vld [vmem:[#allocation8 + $0x100] sm:$0xff]
    %v352 = vld [vmem:[#allocation8 + $0x108] sm:$0xff]
    %v353 = vld [vmem:[#allocation8 + $0x110] sm:$0xff]
    %v354 = vld [vmem:[#allocation8 + $0x118] sm:$0xff]
    %v355 = vld [vmem:[#allocation8 + $0x120] sm:$0xff]
    %v356 = vld [vmem:[#allocation8 + $0x128] sm:$0xff]
    %v357 = vld [vmem:[#allocation8 + $0x130] sm:$0xff]
    %v358 = vld [vmem:[#allocation8 + $0x138] sm:$0xff]
    %v359 = vld [vmem:[#allocation8 + $0x140] sm:$0xff]
    %v360 = vld [vmem:[#allocation8 + $0x148] sm:$0xff]
    %v361 = vld [vmem:[#allocation8 + $0x150] sm:$0xff]
    %v362 = vld [vmem:[#allocation8 + $0x158] sm:$0xff]
    %v363 = vld [vmem:[#allocation8 + $0x160] sm:$0xff]
    %v364 = vld [vmem:[#allocation8 + $0x168] sm:$0xff]
    %v365 = vld [vmem:[#allocation8 + $0x170] sm:$0xff]
    %v366 = vld [vmem:[#allocation8 + $0x178] sm:$0xff]
    %v367 = vld [vmem:[%s4] sm:$0x1]
    %v368 = vlaneseq
    %v369 = vshrl.u32 %v368, 7
    %v370 = vld [vmem:[#allocation2 + $0x10] sm:$0xff]
    %v371 = vld [vmem:[#allocation2 + $0x18] sm:$0xff]
    %v372 = vld [vmem:[#allocation2 + $0x20] sm:$0xff]
    %v373 = vld [vmem:[#allocation2 + $0x28] sm:$0xff]
    %v374 = vld [vmem:[#allocation2 + $0x30] sm:$0xff]
    %v375 = vld [vmem:[#allocation2 + $0x38] sm:$0xff]
    %v376 = vld [vmem:[#allocation2 + $0x40] sm:$0xff]
    %v377 = vld [vmem:[#allocation2 + $0x48] sm:$0xff]
    %v378 = vld [vmem:[#allocation2 + $0x50] sm:$0xff]
    %v379 = vld [vmem:[#allocation2 + $0x58] sm:$0xff]
    %v380 = vld [vmem:[#allocation2 + $0x60] sm:$0xff]
    %v381 = vld [vmem:[#allocation2 + $0x68] sm:$0xff]
    %v382 = vld [vmem:[#allocation2 + $0x70] sm:$0xff]
    %v383 = vld [vmem:[#allocation2 + $0x78] sm:$0xff]
    %v384 = vld [vmem:[#allocation2 + $0x80] sm:$0xff]
    %v385 = vld [vmem:[#allocation2 + $0x88] sm:$0xff]
    %s386 = scalar_lea.vmem [#allocation9], 16
    %v387 = vld [vmem:[%s386] sm:$0xff]
    %v388 = vld [vmem:[%s386 + $0x8] sm:$0xff]
    %389 = vmatprep.subr.mxu0 0.0
    %390 = vmatpush1.msra.mxu0 %v370
    %391 = vmatprep.subr.mxu0 0.0
    %392 = vmatpush1.msra.mxu0 %v371
    %393 = vmatprep.subr.mxu0 0.0
    %394 = vmatpush1.msra.mxu0 %v372
    %395 = vmatprep.subr.mxu0 0.0
    %396 = vmatpush1.msra.mxu0 %v373
    %397 = vmatprep.subr.mxu0 0.0
    %398 = vmatpush1.msra.mxu0 %v374
    %399 = vmatprep.subr.mxu0 0.0
    %400 = vmatpush1.msra.mxu0 %v375
    %401 = vmatprep.subr.mxu0 0.0
    %402 = vmatpush1.msra.mxu0 %v376
    %403 = vmatprep.subr.mxu0 0.0
    %404 = vmatpush1.msra.mxu0 %v377
    %405 = vmatprep.subr.mxu0 0.0
    %406 = vmatpush1.msra.mxu0 %v378
    %407 = vmatprep.subr.mxu0 0.0
    %408 = vmatpush1.msra.mxu0 %v379
    %409 = vmatprep.subr.mxu0 0.0
    %410 = vmatpush1.msra.mxu0 %v380
    %411 = vmatprep.subr.mxu0 0.0
    %412 = vmatpush1.msra.mxu0 %v381
    %413 = vmatprep.subr.mxu0 0.0
    %414 = vmatpush1.msra.mxu0 %v382
    %415 = vmatprep.subr.mxu0 0.0
    %416 = vmatpush1.msra.mxu0 %v383
    %417 = vmatprep.subr.mxu0 0.0
    %418 = vmatpush1.msra.mxu0 %v384
    %419 = vmatprep.subr.mxu0 0.0
    %420 = vmatpush1.msra.mxu0 %v385
    %421 = vmatprep.subr.mxu0 0.0
    %422 = vmatpush1.msra.mxu0 0.0
    %423 = vmatprep.subr.mxu0 0.0
    %424 = vmatpush1.msra.mxu0 0.0
    %425 = vmatprep.subr.mxu0 0.0
    %426 = vmatpush1.msra.mxu0 0.0
    %427 = vmatprep.subr.mxu0 0.0
    %428 = vmatpush1.msra.mxu0 0.0
    %429 = vmatprep.subr.mxu0 0.0
    %430 = vmatpush1.msra.mxu0 0.0
    %431 = vmatprep.subr.mxu0 0.0
    %432 = vmatpush1.msra.mxu0 0.0
    %433 = vmatprep.subr.mxu0 0.0
    %434 = vmatpush1.msra.mxu0 0.0
    %435 = vmatprep.subr.mxu0 0.0
    %436 = vmatpush1.msra.mxu0 0.0
    %437 = vmatprep.subr.mxu0 0.0
    %438 = vmatpush1.msra.mxu0 0.0
    %439 = vmatprep.subr.mxu0 0.0
    %440 = vmatpush1.msra.mxu0 0.0
    %441 = vmatprep.subr.mxu0 0.0
    %442 = vmatpush1.msra.mxu0 0.0
    %443 = vmatprep.subr.mxu0 0.0
    %444 = vmatpush1.msra.mxu0 0.0
    %445 = vmatprep.subr.mxu0 0.0
    %446 = vmatpush1.msra.mxu0 0.0
    %447 = vmatprep.subr.mxu0 0.0
    %448 = vmatpush1.msra.mxu0 0.0
    %449 = vmatprep.subr.mxu0 0.0
    %450 = vmatpush1.msra.mxu0 0.0
    %451 = vmatprep.subr.mxu0 0.0
    %452 = vmatpush1.msra.mxu0 0.0
    %453 = vmatprep.mubr.f32.mxu0 0.0
    %454 = vmatmul.mubr.f32.gmra.mrb[0].mxu0 %v387
    %v455 = vpop.f32.mrb[0].mxu0
    %v456 = vadd.f32 0.0, %v455
    %v457 = vpop.f32.mrb[0].mxu0
    %458 = vmatprep.mubr.f32.mxu0 0.0
    %459 = vmatmul.mubr.f32.gmra.mrb[0].mxu0 %v388
    %v460 = vpop.f32.mrb[0].mxu0
    %v461 = vadd.f32 0.0, %v460
    %v462 = vpop.f32.mrb[0].mxu0
    %463 = vdwg.mxu0
    %v464 = vld [vmem:[#allocation2 + $0x8] sm:$0xff]
    %465 = vmatprep.subr.mxu0 0.0
    %466 = vmatpush1.msra.mxu0 %v335
    %467 = vmatprep.subr.mxu0 0.0
    %468 = vmatpush1.msra.mxu0 %v336
    %469 = vmatprep.subr.mxu0 0.0
    %470 = vmatpush1.msra.mxu0 %v337
    %471 = vmatprep.subr.mxu0 0.0
    %472 = vmatpush1.msra.mxu0 %v338
    %473 = vmatprep.subr.mxu0 0.0
    %474 = vmatpush1.msra.mxu0 %v339
    %475 = vmatprep.subr.mxu0 0.0
    %476 = vmatpush1.msra.mxu0 %v340
    %477 = vmatprep.subr.mxu0 0.0
    %478 = vmatpush1.msra.mxu0 %v341
    %479 = vmatprep.subr.mxu0 0.0
    %480 = vmatpush1.msra.mxu0 %v342
    %481 = vmatprep.subr.mxu0 0.0
    %482 = vmatpush1.msra.mxu0 %v343
    %483 = vmatprep.subr.mxu0 0.0
    %484 = vmatpush1.msra.mxu0 %v344
    %485 = vmatprep.subr.mxu0 0.0
    %486 = vmatpush1.msra.mxu0 %v345
    %487 = vmatprep.subr.mxu0 0.0
    %488 = vmatpush1.msra.mxu0 %v346
    %489 = vmatprep.subr.mxu0 0.0
    %490 = vmatpush1.msra.mxu0 %v347
    %491 = vmatprep.subr.mxu0 0.0
    %492 = vmatpush1.msra.mxu0 %v348
    %493 = vmatprep.subr.mxu0 0.0
    %494 = vmatpush1.msra.mxu0 %v349
    %495 = vmatprep.subr.mxu0 0.0
    %496 = vmatpush1.msra.mxu0 %v350
    %497 = vmatprep.subr.mxu0 0.0
    %498 = vmatpush1.msra.mxu0 0.0
    %499 = vmatprep.subr.mxu0 0.0
    %500 = vmatpush1.msra.mxu0 0.0
    %501 = vmatprep.subr.mxu0 0.0
    %502 = vmatpush1.msra.mxu0 0.0
    %503 = vmatprep.subr.mxu0 0.0
    %504 = vmatpush1.msra.mxu0 0.0
    %505 = vmatprep.subr.mxu0 0.0
    %506 = vmatpush1.msra.mxu0 0.0
    %507 = vmatprep.subr.mxu0 0.0
    %508 = vmatpush1.msra.mxu0 0.0
    %509 = vmatprep.subr.mxu0 0.0
    %510 = vmatpush1.msra.mxu0 0.0
    %511 = vmatprep.subr.mxu0 0.0
    %512 = vmatpush1.msra.mxu0 0.0
    %513 = vmatprep.subr.mxu0 0.0
    %514 = vmatpush1.msra.mxu0 0.0
    %515 = vmatprep.subr.mxu0 0.0
    %516 = vmatpush1.msra.mxu0 0.0
    %517 = vmatprep.subr.mxu0 0.0
    %518 = vmatpush1.msra.mxu0 0.0
    %519 = vmatprep.subr.mxu0 0.0
    %520 = vmatpush1.msra.mxu0 0.0
    %521 = vmatprep.subr.mxu0 0.0
    %522 = vmatpush1.msra.mxu0 0.0
    %523 = vmatprep.subr.mxu0 0.0
    %524 = vmatpush1.msra.mxu0 0.0
    %525 = vmatprep.subr.mxu0 0.0
    %526 = vmatpush1.msra.mxu0 0.0
    %527 = vmatprep.subr.mxu0 0.0
    %528 = vmatpush1.msra.mxu0 0.0
    %529 = vmatprep.mubr.f32.mxu0 0.0
    %530 = vmatmul.mubr.f32.gmra.mrb[0].mxu0 %v461
    %v531 = vpop.f32.mrb[0].mxu0
    %v532 = vadd.f32 0.0, %v531
    %v533 = vpop.f32.mrb[0].mxu0
    %534 = vdwg.mxu0
    %535 = vmatprep.subr.mxu0 0.0
    %536 = vmatpush1.msra.mxu0 %v319
    %537 = vmatprep.subr.mxu0 0.0
    %538 = vmatpush1.msra.mxu0 %v320
    %539 = vmatprep.subr.mxu0 0.0
    %540 = vmatpush1.msra.mxu0 %v321
    %541 = vmatprep.subr.mxu0 0.0
    %542 = vmatpush1.msra.mxu0 %v322
    %543 = vmatprep.subr.mxu0 0.0
    %544 = vmatpush1.msra.mxu0 %v323
    %545 = vmatprep.subr.mxu0 0.0
    %546 = vmatpush1.msra.mxu0 %v324
    %547 = vmatprep.subr.mxu0 0.0
    %548 = vmatpush1.msra.mxu0 %v325
    %549 = vmatprep.subr.mxu0 0.0
    %550 = vmatpush1.msra.mxu0 %v326
    %551 = vmatprep.subr.mxu0 0.0
    %552 = vmatpush1.msra.mxu0 %v327
    %553 = vmatprep.subr.mxu0 0.0
    %554 = vmatpush1.msra.mxu0 %v328
    %555 = vmatprep.subr.mxu0 0.0
    %556 = vmatpush1.msra.mxu0 %v329
    %557 = vmatprep.subr.mxu0 0.0
    %558 = vmatpush1.msra.mxu0 %v330
    %559 = vmatprep.subr.mxu0 0.0
    %560 = vmatpush1.msra.mxu0 %v331
    %561 = vmatprep.subr.mxu0 0.0
    %562 = vmatpush1.msra.mxu0 %v332
    %563 = vmatprep.subr.mxu0 0.0
    %564 = vmatpush1.msra.mxu0 %v333
    %565 = vmatprep.subr.mxu0 0.0
    %566 = vmatpush1.msra.mxu0 %v334
    %567 = vmatprep.subr.mxu0 0.0
    %568 = vmatpush1.msra.mxu0 0.0
    %569 = vmatprep.subr.mxu0 0.0
    %570 = vmatpush1.msra.mxu0 0.0
    %571 = vmatprep.subr.mxu0 0.0
    %572 = vmatpush1.msra.mxu0 0.0
    %573 = vmatprep.subr.mxu0 0.0
    %574 = vmatpush1.msra.mxu0 0.0
    %575 = vmatprep.subr.mxu0 0.0
    %576 = vmatpush1.msra.mxu0 0.0
    %577 = vmatprep.subr.mxu0 0.0
    %578 = vmatpush1.msra.mxu0 0.0
    %579 = vmatprep.subr.mxu0 0.0
    %580 = vmatpush1.msra.mxu0 0.0
    %581 = vmatprep.subr.mxu0 0.0
    %582 = vmatpush1.msra.mxu0 0.0
    %583 = vmatprep.subr.mxu0 0.0
    %584 = vmatpush1.msra.mxu0 0.0
    %585 = vmatprep.subr.mxu0 0.0
    %586 = vmatpush1.msra.mxu0 0.0
    %587 = vmatprep.subr.mxu0 0.0
    %588 = vmatpush1.msra.mxu0 0.0
    %589 = vmatprep.subr.mxu0 0.0
    %590 = vmatpush1.msra.mxu0 0.0
    %591 = vmatprep.subr.mxu0 0.0
    %592 = vmatpush1.msra.mxu0 0.0
    %593 = vmatprep.subr.mxu0 0.0
    %594 = vmatpush1.msra.mxu0 0.0
    %595 = vmatprep.subr.mxu0 0.0
    %596 = vmatpush1.msra.mxu0 0.0
    %597 = vmatprep.subr.mxu0 0.0
    %598 = vmatpush1.msra.mxu0 0.0
    %599 = vmatprep.mubr.f32.mxu0 0.0
    %600 = vmatmul.mubr.f32.gmra.mrb[0].mxu0 %v456
    %v601 = vpop.f32.mrb[0].mxu0
    %v602 = vadd.f32 %v532, %v601
    %v603 = vpop.f32.mrb[0].mxu0
    %604 = vdwg.mxu0
    %605 = vmatprep.subr.mxu0 0.0
    %606 = vmatpush1.msra.mxu0 %v351
    %607 = vmatprep.subr.mxu0 0.0
    %608 = vmatpush1.msra.mxu0 %v352
    %609 = vmatprep.subr.mxu0 0.0
    %610 = vmatpush1.msra.mxu0 %v353
    %611 = vmatprep.subr.mxu0 0.0
    %612 = vmatpush1.msra.mxu0 %v354
    %613 = vmatprep.subr.mxu0 0.0
    %614 = vmatpush1.msra.mxu0 %v355
    %615 = vmatprep.subr.mxu0 0.0
    %616 = vmatpush1.msra.mxu0 %v356
    %617 = vmatprep.subr.mxu0 0.0
    %618 = vmatpush1.msra.mxu0 %v357
    %619 = vmatprep.subr.mxu0 0.0
    %620 = vmatpush1.msra.mxu0 %v358
    %621 = vmatprep.subr.mxu0 0.0
    %622 = vmatpush1.msra.mxu0 %v359
    %623 = vmatprep.subr.mxu0 0.0
    %624 = vmatpush1.msra.mxu0 %v360
    %625 = vmatprep.subr.mxu0 0.0
    %626 = vmatpush1.msra.mxu0 %v361
    %627 = vmatprep.subr.mxu0 0.0
    %628 = vmatpush1.msra.mxu0 %v362
    %629 = vmatprep.subr.mxu0 0.0
    %630 = vmatpush1.msra.mxu0 %v363
    %631 = vmatprep.subr.mxu0 0.0
    %632 = vmatpush1.msra.mxu0 %v364
    %633 = vmatprep.subr.mxu0 0.0
    %634 = vmatpush1.msra.mxu0 %v365
    %635 = vmatprep.subr.mxu0 0.0
    %636 = vmatpush1.msra.mxu0 %v366
    %637 = vmatprep.subr.mxu0 0.0
    %638 = vmatpush1.msra.mxu0 0.0
    %639 = vmatprep.subr.mxu0 0.0
    %640 = vmatpush1.msra.mxu0 0.0
    %641 = vmatprep.subr.mxu0 0.0
    %642 = vmatpush1.msra.mxu0 0.0
    %643 = vmatprep.subr.mxu0 0.0
    %644 = vmatpush1.msra.mxu0 0.0
    %645 = vmatprep.subr.mxu0 0.0
    %646 = vmatpush1.msra.mxu0 0.0
    %647 = vmatprep.subr.mxu0 0.0
    %648 = vmatpush1.msra.mxu0 0.0
    %649 = vmatprep.subr.mxu0 0.0
    %650 = vmatpush1.msra.mxu0 0.0
    %651 = vmatprep.subr.mxu0 0.0
    %652 = vmatpush1.msra.mxu0 0.0
    %653 = vmatprep.subr.mxu0 0.0
    %654 = vmatpush1.msra.mxu0 0.0
    %655 = vmatprep.subr.mxu0 0.0
    %656 = vmatpush1.msra.mxu0 0.0
    %657 = vmatprep.subr.mxu0 0.0
    %658 = vmatpush1.msra.mxu0 0.0
    %659 = vmatprep.subr.mxu0 0.0
    %660 = vmatpush1.msra.mxu0 0.0
    %661 = vmatprep.subr.mxu0 0.0
    %662 = vmatpush1.msra.mxu0 0.0
    %663 = vmatprep.subr.mxu0 0.0
    %664 = vmatpush1.msra.mxu0 0.0
    %665 = vmatprep.subr.mxu0 0.0
    %666 = vmatpush1.msra.mxu0 0.0
    %667 = vmatprep.subr.mxu0 0.0
    %668 = vmatpush1.msra.mxu0 0.0
    %669 = vmatprep.mubr.f32.mxu0 0.0
    %670 = vmatmul.mubr.f32.gmra.mrb[0].mxu0 %v464
    %v671 = vpop.f32.mrb[0].mxu0
    %v672 = vadd.f32 0.0, %v671
    %v673 = vpop.f32.mrb[0].mxu0
    %674 = vdwg.mxu0
    %v675 = vadd.f32 %v602, %v672
    %v677 = vlaneseq
    %v678 = vshrl.u32 %v677, 7
    %v679 = vsub.s32 0, %v678
    %v680 = vrot.slane %v367, %v679
    %v682 = vadd.f32 %v675, %v680
    %v683 = vmax.f32 %v682, 0.0
    %vm684 = vcmp.lt.s32.totalorder %v369, 4
    %v685 = vsel %vm684, %v683, %v464
    %686 = vst [vmem:[#allocation2 + $0x8] sm:$0xff] %v685
    %v687 = vld [vmem:[#allocation2 + $0x8] sm:$0xff]
    %v688 = vld [vmem:[#allocation2 + $0x10] sm:$0xff]
    %v689 = vld [vmem:[#allocation2 + $0x18] sm:$0xff]
    %v690 = vld [vmem:[#allocation2 + $0x20] sm:$0xff]
    %v691 = vld [vmem:[#allocation2 + $0x28] sm:$0xff]
    %v692 = vld [vmem:[#allocation2 + $0x30] sm:$0xff]
    %v693 = vld [vmem:[#allocation2 + $0x38] sm:$0xff]
    %v694 = vld [vmem:[#allocation2 + $0x40] sm:$0xff]
    %v695 = vld [vmem:[#allocation2 + $0x48] sm:$0xff]
    %v696 = vld [vmem:[#allocation2 + $0x50] sm:$0xff]
    %v697 = vld [vmem:[#allocation2 + $0x58] sm:$0xff]
    %v698 = vld [vmem:[#allocation2 + $0x60] sm:$0xff]
    %v699 = vld [vmem:[#allocation2 + $0x68] sm:$0xff]
    %v700 = vld [vmem:[#allocation2 + $0x70] sm:$0xff]
    %v701 = vld [vmem:[#allocation2 + $0x78] sm:$0xff]
    %v702 = vld [vmem:[#allocation2 + $0x80] sm:$0xff]
    %v703 = vld [vmem:[#allocation9] sm:$0xff]
    %v704 = vld [vmem:[#allocation9 + $0x8] sm:$0xff]
    %705 = vmatprep.subr.mxu0 0.0
    %706 = vmatpush1.msra.mxu0 %v687
    %707 = vmatprep.subr.mxu0 0.0
    %708 = vmatpush1.msra.mxu0 %v688
    %709 = vmatprep.subr.mxu0 0.0
    %710 = vmatpush1.msra.mxu0 %v689
    %711 = vmatprep.subr.mxu0 0.0
    %712 = vmatpush1.msra.mxu0 %v690
    %713 = vmatprep.subr.mxu0 0.0
    %714 = vmatpush1.msra.mxu0 %v691
    %715 = vmatprep.subr.mxu0 0.0
    %716 = vmatpush1.msra.mxu0 %v692
    %717 = vmatprep.subr.mxu0 0.0
    %718 = vmatpush1.msra.mxu0 %v693
    %719 = vmatprep.subr.mxu0 0.0
    %720 = vmatpush1.msra.mxu0 %v694
    %721 = vmatprep.subr.mxu0 0.0
    %722 = vmatpush1.msra.mxu0 %v695
    %723 = vmatprep.subr.mxu0 0.0
    %724 = vmatpush1.msra.mxu0 %v696
    %725 = vmatprep.subr.mxu0 0.0
    %726 = vmatpush1.msra.mxu0 %v697
    %727 = vmatprep.subr.mxu0 0.0
    %728 = vmatpush1.msra.mxu0 %v698
    %729 = vmatprep.subr.mxu0 0.0
    %730 = vmatpush1.msra.mxu0 %v699
    %731 = vmatprep.subr.mxu0 0.0
    %732 = vmatpush1.msra.mxu0 %v700
    %733 = vmatprep.subr.mxu0 0.0
    %734 = vmatpush1.msra.mxu0 %v701
    %735 = vmatprep.subr.mxu0 0.0
    %736 = vmatpush1.msra.mxu0 %v702
    %737 = vmatprep.subr.mxu0 0.0
    %738 = vmatpush1.msra.mxu0 0.0
    %739 = vmatprep.subr.mxu0 0.0
    %740 = vmatpush1.msra.mxu0 0.0
    %741 = vmatprep.subr.mxu0 0.0
    %742 = vmatpush1.msra.mxu0 0.0
    %743 = vmatprep.subr.mxu0 0.0
    %744 = vmatpush1.msra.mxu0 0.0
    %745 = vmatprep.subr.mxu0 0.0
    %746 = vmatpush1.msra.mxu0 0.0
    %747 = vmatprep.subr.mxu0 0.0
    %748 = vmatpush1.msra.mxu0 0.0
    %749 = vmatprep.subr.mxu0 0.0
    %750 = vmatpush1.msra.mxu0 0.0
    %751 = vmatprep.subr.mxu0 0.0
    %752 = vmatpush1.msra.mxu0 0.0
    %753 = vmatprep.subr.mxu0 0.0
    %754 = vmatpush1.msra.mxu0 0.0
    %755 = vmatprep.subr.mxu0 0.0
    %756 = vmatpush1.msra.mxu0 0.0
    %757 = vmatprep.subr.mxu0 0.0
    %758 = vmatpush1.msra.mxu0 0.0
    %759 = vmatprep.subr.mxu0 0.0
    %760 = vmatpush1.msra.mxu0 0.0
    %761 = vmatprep.subr.mxu0 0.0
    %762 = vmatpush1.msra.mxu0 0.0
    %763 = vmatprep.subr.mxu0 0.0
    %764 = vmatpush1.msra.mxu0 0.0
    %765 = vmatprep.subr.mxu0 0.0
    %766 = vmatpush1.msra.mxu0 0.0
    %767 = vmatprep.subr.mxu0 0.0
    %768 = vmatpush1.msra.mxu0 0.0
    %769 = vmatprep.mubr.f32.mxu0 0.0
    %770 = vmatmul.mubr.f32.gmra.mrb[0].mxu0 %v703
    %v771 = vpop.f32.mrb[0].mxu0
    %v772 = vadd.f32 0.0, %v771
    %v773 = vpop.f32.mrb[0].mxu0
    %774 = vmatprep.mubr.f32.mxu0 0.0
    %775 = vmatmul.mubr.f32.gmra.mrb[0].mxu0 %v704
    %v776 = vpop.f32.mrb[0].mxu0
    %v777 = vadd.f32 0.0, %v776
    %v778 = vpop.f32.mrb[0].mxu0
    %779 = vdwg.mxu0
    %v780 = vld [vmem:[#allocation2] sm:$0xff]
    %781 = vmatprep.subr.mxu0 0.0
    %782 = vmatpush1.msra.mxu0 %v335
    %783 = vmatprep.subr.mxu0 0.0
    %784 = vmatpush1.msra.mxu0 %v336
    %785 = vmatprep.subr.mxu0 0.0
    %786 = vmatpush1.msra.mxu0 %v337
    %787 = vmatprep.subr.mxu0 0.0
    %788 = vmatpush1.msra.mxu0 %v338
    %789 = vmatprep.subr.mxu0 0.0
    %790 = vmatpush1.msra.mxu0 %v339
    %791 = vmatprep.subr.mxu0 0.0
    %792 = vmatpush1.msra.mxu0 %v340
    %793 = vmatprep.subr.mxu0 0.0
    %794 = vmatpush1.msra.mxu0 %v341
    %795 = vmatprep.subr.mxu0 0.0
    %796 = vmatpush1.msra.mxu0 %v342
    %797 = vmatprep.subr.mxu0 0.0
    %798 = vmatpush1.msra.mxu0 %v343
    %799 = vmatprep.subr.mxu0 0.0
    %800 = vmatpush1.msra.mxu0 %v344
    %801 = vmatprep.subr.mxu0 0.0
    %802 = vmatpush1.msra.mxu0 %v345
    %803 = vmatprep.subr.mxu0 0.0
    %804 = vmatpush1.msra.mxu0 %v346
    %805 = vmatprep.subr.mxu0 0.0
    %806 = vmatpush1.msra.mxu0 %v347
    %807 = vmatprep.subr.mxu0 0.0
    %808 = vmatpush1.msra.mxu0 %v348
    %809 = vmatprep.subr.mxu0 0.0
    %810 = vmatpush1.msra.mxu0 %v349
    %811 = vmatprep.subr.mxu0 0.0
    %812 = vmatpush1.msra.mxu0 %v350
    %813 = vmatprep.subr.mxu0 0.0
    %814 = vmatpush1.msra.mxu0 0.0
    %815 = vmatprep.subr.mxu0 0.0
    %816 = vmatpush1.msra.mxu0 0.0
    %817 = vmatprep.subr.mxu0 0.0
    %818 = vmatpush1.msra.mxu0 0.0
    %819 = vmatprep.subr.mxu0 0.0
    %820 = vmatpush1.msra.mxu0 0.0
    %821 = vmatprep.subr.mxu0 0.0
    %822 = vmatpush1.msra.mxu0 0.0
    %823 = vmatprep.subr.mxu0 0.0
    %824 = vmatpush1.msra.mxu0 0.0
    %825 = vmatprep.subr.mxu0 0.0
    %826 = vmatpush1.msra.mxu0 0.0
    %827 = vmatprep.subr.mxu0 0.0
    %828 = vmatpush1.msra.mxu0 0.0
    %829 = vmatprep.subr.mxu0 0.0
    %830 = vmatpush1.msra.mxu0 0.0
    %831 = vmatprep.subr.mxu0 0.0
    %832 = vmatpush1.msra.mxu0 0.0
    %833 = vmatprep.subr.mxu0 0.0
    %834 = vmatpush1.msra.mxu0 0.0
    %835 = vmatprep.subr.mxu0 0.0
    %836 = vmatpush1.msra.mxu0 0.0
    %837 = vmatprep.subr.mxu0 0.0
    %838 = vmatpush1.msra.mxu0 0.0
    %839 = vmatprep.subr.mxu0 0.0
    %840 = vmatpush1.msra.mxu0 0.0
    %841 = vmatprep.subr.mxu0 0.0
    %842 = vmatpush1.msra.mxu0 0.0
    %843 = vmatprep.subr.mxu0 0.0
    %844 = vmatpush1.msra.mxu0 0.0
    %845 = vmatprep.mubr.f32.mxu0 0.0
    %846 = vmatmul.mubr.f32.gmra.mrb[0].mxu0 %v777
    %v847 = vpop.f32.mrb[0].mxu0
    %v848 = vadd.f32 0.0, %v847
    %v849 = vpop.f32.mrb[0].mxu0
    %850 = vdwg.mxu0
    %851 = vmatprep.subr.mxu0 0.0
    %852 = vmatpush1.msra.mxu0 %v319
    %853 = vmatprep.subr.mxu0 0.0
    %854 = vmatpush1.msra.mxu0 %v320
    %855 = vmatprep.subr.mxu0 0.0
    %856 = vmatpush1.msra.mxu0 %v321
    %857 = vmatprep.subr.mxu0 0.0
    %858 = vmatpush1.msra.mxu0 %v322
    %859 = vmatprep.subr.mxu0 0.0
    %860 = vmatpush1.msra.mxu0 %v323
    %861 = vmatprep.subr.mxu0 0.0
    %862 = vmatpush1.msra.mxu0 %v324
    %863 = vmatprep.subr.mxu0 0.0
    %864 = vmatpush1.msra.mxu0 %v325
    %865 = vmatprep.subr.mxu0 0.0
    %866 = vmatpush1.msra.mxu0 %v326
    %867 = vmatprep.subr.mxu0 0.0
    %868 = vmatpush1.msra.mxu0 %v327
    %869 = vmatprep.subr.mxu0 0.0
    %870 = vmatpush1.msra.mxu0 %v328
    %871 = vmatprep.subr.mxu0 0.0
    %872 = vmatpush1.msra.mxu0 %v329
    %873 = vmatprep.subr.mxu0 0.0
    %874 = vmatpush1.msra.mxu0 %v330
    %875 = vmatprep.subr.mxu0 0.0
    %876 = vmatpush1.msra.mxu0 %v331
    %877 = vmatprep.subr.mxu0 0.0
    %878 = vmatpush1.msra.mxu0 %v332
    %879 = vmatprep.subr.mxu0 0.0
    %880 = vmatpush1.msra.mxu0 %v333
    %881 = vmatprep.subr.mxu0 0.0
    %882 = vmatpush1.msra.mxu0 %v334
    %883 = vmatprep.subr.mxu0 0.0
    %884 = vmatpush1.msra.mxu0 0.0
    %885 = vmatprep.subr.mxu0 0.0
    %886 = vmatpush1.msra.mxu0 0.0
    %887 = vmatprep.subr.mxu0 0.0
    %888 = vmatpush1.msra.mxu0 0.0
    %889 = vmatprep.subr.mxu0 0.0
    %890 = vmatpush1.msra.mxu0 0.0
    %891 = vmatprep.subr.mxu0 0.0
    %892 = vmatpush1.msra.mxu0 0.0
    %893 = vmatprep.subr.mxu0 0.0
    %894 = vmatpush1.msra.mxu0 0.0
    %895 = vmatprep.subr.mxu0 0.0
    %896 = vmatpush1.msra.mxu0 0.0
    %897 = vmatprep.subr.mxu0 0.0
    %898 = vmatpush1.msra.mxu0 0.0
    %899 = vmatprep.subr.mxu0 0.0
    %900 = vmatpush1.msra.mxu0 0.0
    %901 = vmatprep.subr.mxu0 0.0
    %902 = vmatpush1.msra.mxu0 0.0
    %903 = vmatprep.subr.mxu0 0.0
    %904 = vmatpush1.msra.mxu0 0.0
    %905 = vmatprep.subr.mxu0 0.0
    %906 = vmatpush1.msra.mxu0 0.0
    %907 = vmatprep.subr.mxu0 0.0
    %908 = vmatpush1.msra.mxu0 0.0
    %909 = vmatprep.subr.mxu0 0.0
    %910 = vmatpush1.msra.mxu0 0.0
    %911 = vmatprep.subr.mxu0 0.0
    %912 = vmatpush1.msra.mxu0 0.0
    %913 = vmatprep.subr.mxu0 0.0
    %914 = vmatpush1.msra.mxu0 0.0
    %915 = vmatprep.mubr.f32.mxu0 0.0
    %916 = vmatmul.mubr.f32.gmra.mrb[0].mxu0 %v772
    %v917 = vpop.f32.mrb[0].mxu0
    %v918 = vadd.f32 %v848, %v917
    %v919 = vpop.f32.mrb[0].mxu0
    %920 = vdwg.mxu0
    %921 = vmatprep.subr.mxu0 0.0
    %922 = vmatpush1.msra.mxu0 %v351
    %923 = vmatprep.subr.mxu0 0.0
    %924 = vmatpush1.msra.mxu0 %v352
    %925 = vmatprep.subr.mxu0 0.0
    %926 = vmatpush1.msra.mxu0 %v353
    %927 = vmatprep.subr.mxu0 0.0
    %928 = vmatpush1.msra.mxu0 %v354
    %929 = vmatprep.subr.mxu0 0.0
    %930 = vmatpush1.msra.mxu0 %v355
    %931 = vmatprep.subr.mxu0 0.0
    %932 = vmatpush1.msra.mxu0 %v356
    %933 = vmatprep.subr.mxu0 0.0
    %934 = vmatpush1.msra.mxu0 %v357
    %935 = vmatprep.subr.mxu0 0.0
    %936 = vmatpush1.msra.mxu0 %v358
    %937 = vmatprep.subr.mxu0 0.0
    %938 = vmatpush1.msra.mxu0 %v359
    %939 = vmatprep.subr.mxu0 0.0
    %940 = vmatpush1.msra.mxu0 %v360
    %941 = vmatprep.subr.mxu0 0.0
    %942 = vmatpush1.msra.mxu0 %v361
    %943 = vmatprep.subr.mxu0 0.0
    %944 = vmatpush1.msra.mxu0 %v362
    %945 = vmatprep.subr.mxu0 0.0
    %946 = vmatpush1.msra.mxu0 %v363
    %947 = vmatprep.subr.mxu0 0.0
    %948 = vmatpush1.msra.mxu0 %v364
    %949 = vmatprep.subr.mxu0 0.0
    %950 = vmatpush1.msra.mxu0 %v365
    %951 = vmatprep.subr.mxu0 0.0
    %952 = vmatpush1.msra.mxu0 %v366
    %953 = vmatprep.subr.mxu0 0.0
    %954 = vmatpush1.msra.mxu0 0.0
    %955 = vmatprep.subr.mxu0 0.0
    %956 = vmatpush1.msra.mxu0 0.0
    %957 = vmatprep.subr.mxu0 0.0
    %958 = vmatpush1.msra.mxu0 0.0
    %959 = vmatprep.subr.mxu0 0.0
    %960 = vmatpush1.msra.mxu0 0.0
    %961 = vmatprep.subr.mxu0 0.0
    %962 = vmatpush1.msra.mxu0 0.0
    %963 = vmatprep.subr.mxu0 0.0
    %964 = vmatpush1.msra.mxu0 0.0
    %965 = vmatprep.subr.mxu0 0.0
    %966 = vmatpush1.msra.mxu0 0.0
    %967 = vmatprep.subr.mxu0 0.0
    %968 = vmatpush1.msra.mxu0 0.0
    %969 = vmatprep.subr.mxu0 0.0
    %970 = vmatpush1.msra.mxu0 0.0
    %971 = vmatprep.subr.mxu0 0.0
    %972 = vmatpush1.msra.mxu0 0.0
    %973 = vmatprep.subr.mxu0 0.0
    %974 = vmatpush1.msra.mxu0 0.0
    %975 = vmatprep.subr.mxu0 0.0
    %976 = vmatpush1.msra.mxu0 0.0
    %977 = vmatprep.subr.mxu0 0.0
    %978 = vmatpush1.msra.mxu0 0.0
    %979 = vmatprep.subr.mxu0 0.0
    %980 = vmatpush1.msra.mxu0 0.0
    %981 = vmatprep.subr.mxu0 0.0
    %982 = vmatpush1.msra.mxu0 0.0
    %983 = vmatprep.subr.mxu0 0.0
    %984 = vmatpush1.msra.mxu0 0.0
    %985 = vmatprep.mubr.f32.mxu0 0.0
    %986 = vmatmul.mubr.f32.gmra.mrb[0].mxu0 %v780
    %v987 = vpop.f32.mrb[0].mxu0
    %v988 = vadd.f32 0.0, %v987
    %v989 = vpop.f32.mrb[0].mxu0
    %990 = vdwg.mxu0
    %v991 = vadd.f32 %v918, %v988
    %v992 = vadd.f32 %v991, %v680
    %v993 = vmax.f32 %v992, 0.0
    %vm994 = vcmp.lt.s32.totalorder %v369, 2
    %v995 = vsel %vm994, %v993, %v780
    %996 = vst [vmem:[#allocation2] sm:$0xff] %v995
    %v997 = vld [vmem:[#allocation2] sm:$0xff]
    %998 = vst [vmem:[#allocation11] sm:$0xff] %v997
    // Predicated region
    $region42: #{tpu_custom_call.1} parent=1 // pred_check
      _
    $region43: #{tpu_custom_call.1} parent=1 // pred_check_branch
      %1000 = sbr.rel (0) target = $region45
    $region44: #{tpu_custom_call.1} parent=1 // pred_region
      %s1002 = ssub.s32 128, 128
      %1003 = vsyncadd [#allocation5], %s1002
      %s1005 = sshll.u32 [#allocation11], 4
      %s1006 = int_to_ptr.vmem [resolvable:$true] %s1005
      %1008 = dma.vmem_to_hbm [thread:$0]  %s1006, 128, %s6, [#allocation5]
    $region45: #{tpu_custom_call.1} parent=1 // pred_fallthru
      _
    // Predicated region
    $region46: #{tpu_custom_call.1} parent=1 // pred_check
      _
    $region47: #{tpu_custom_call.1} parent=1 // pred_check_branch
      %1010 = sbr.rel (0) target = $region49
    $region48: #{tpu_custom_call.1} parent=1 // pred_region
      %1011 = dma.done [#allocation5], 128
    $region49: #{tpu_custom_call.1} parent=1 // pred_fallthru
      _
    %1012 = vsyncpa [#allocation4], 1
    %1013 = vsyncpa [#allocation7], 1
    %1014 = vsyncpa [#allocation10], 1
    %1015 = vsyncpa [#allocation5], 1

</llo_original>
